<compile_context>
chip_gen: v6e
topology: v6e:2x2x1
jax: 0.10.0
libtpu: 0.0.40
codegen_flags: <defaults>
</compile_context>

<pallas_src>
import math

import jax
import jax.numpy as jnp
from jax.experimental import pallas as pl
from jax.experimental.pallas import tpu as pltpu

TIMESTEPS = 100
MAX_TILE_N = 8192  # lanes per grid step; keeps double-buffered blocks « scoped VMEM
                   # even on v5e (16 MiB default) while staying near the HBM roofline.


# ----------------------------- schedule / buffers ----------------------------
def linear_beta_schedule(timesteps):
    beta_start, beta_end = 1e-4, 0.02
    return jnp.linspace(beta_start, beta_end, timesteps, dtype=jnp.float32)


def make_diffusion_buffers(timesteps):
    betas = linear_beta_schedule(timesteps)
    alphas = 1.0 - betas
    alphas_cumprod = jnp.cumprod(alphas)
    return dict(
        sqrt_alphas_cumprod=jnp.sqrt(alphas_cumprod),
        sqrt_one_minus_alphas_cumprod=jnp.sqrt(1.0 - alphas_cumprod),
    )


def _choose_tile_n(n, max_tn=MAX_TILE_N):
    """Largest N-tile <= max_tn that is a multiple of 128 and divides n.
    Falls back to the full extent n (always a legal block) if none exists."""
    if n <= max_tn:
        return n
    tn = (max_tn // 128) * 128
    while tn >= 128:
        if n % tn == 0:
            return tn
        tn -= 128
    return n


# --------------------------------- kernel ------------------------------------
def _fused_diffusion_kernel(a_ref, s_ref,                       # SMEM per-batch scalars
                            x_ref, eps_ref, cond_ref,           # (1, C, TN) bf16 tiles
                            w1_ref, temb_ref, w2_ref, b2_ref,   # model weights
                            out_ref, sq_ref,                    # outputs
                            xc_scratch):                        # (2C, TN) f32 scratch
    b = pl.program_id(0)          # batch        ("parallel")
    n = pl.program_id(1)          # N-tile index ("arbitrary", sq accumulates over it)
    a = a_ref[b]                  # sqrt(alphas_cumprod)[t_b]
    s = s_ref[b]                  # sqrt(1 - alphas_cumprod)[t_b]

    C = x_ref.shape[1]

    # bf16 at the HBM boundary; all math in f32 (v5e VPU has no bf16).
    x0 = x_ref[0].astype(jnp.float32)        # (C, TN)
    eps = eps_ref[0].astype(jnp.float32)     # (C, TN)
    cond = cond_ref[0].astype(jnp.float32)   # (C, TN)

    # --- q_sample (elementwise on VPU) ---
    x_noisy = a * x0 + s * eps

    # --- fused channel concat: pack [x_noisy ; cond] into a (2C, TN) sublane-dense
    #     slab so layer 1 is a single (Hd, 2C) @ (2C, TN) MXU matmul.
    xc_scratch[pl.ds(0, C), :] = x_noisy
    xc_scratch[pl.ds(C, C), :] = cond

    # --- model: conv1x1 -> SiLU -> conv1x1, time embedding (b1 pre-folded) added ---
    h = (jnp.dot(w1_ref[...], xc_scratch[...],
                 preferred_element_type=jnp.float32)
         + temb_ref[0])                                          # (Hd, TN)
    h = h * jax.nn.sigmoid(h)                                    # SiLU
    out = jnp.dot(w2_ref[...], h,
                  preferred_element_type=jnp.float32) + b2_ref[...]   # (C, TN)

    out_ref[0] = out.astype(out_ref.dtype)

    # --- loss: objective == 'pred_noise' -> target = eps ---
    # per-batch resident accumulator across the N-tile axis
    d = out - eps

    @pl.when(n == 0)
    def _():
        sq_ref[...] = jnp.zeros_like(sq_ref)

    sq_ref[0] += jnp.sum(d * d, keepdims=True)                   # (1, 1)


# --------------------------------- wrapper -----------------------------------
def diffusion_forward_loss(params, buffers, x_start, t, cond, noise):
    """x_start/cond/noise: (B, C, N); t: (B,) int32.  Returns (mse_loss, model_out)."""
    B, C, N = x_start.shape
    Hd = params["w1"].shape[0]
    TN = _choose_tile_n(N)
    NT = N // TN

    a_t = buffers["sqrt_alphas_cumprod"][t].astype(jnp.float32)            # (B,)
    s_t = buffers["sqrt_one_minus_alphas_cumprod"][t].astype(jnp.float32)  # (B,)

    # sinusoidal time embedding + linear projection (glue, tiny, O(B*Hd))
    half = Hd // 2
    freqs = jnp.exp(-math.log(10000.0) *
                    jnp.arange(half, dtype=jnp.float32) / half)
    args = t.astype(jnp.float32)[:, None] * freqs[None, :]
    temb = jnp.concatenate([jnp.sin(args), jnp.cos(args)], axis=-1)        # (B, Hd)
    # fold layer-1 bias b1 into the per-batch embedding -> one less kernel input
    temb = (temb @ params["w_t"] + params["b_t"] + params["b1"]).reshape(B, Hd, 1)

    # activations cross the boundary in bf16 (HBM-bandwidth bound kernel)
    xb = x_start.astype(jnp.bfloat16)
    nb = noise.astype(jnp.bfloat16)
    cb = cond.astype(jnp.bfloat16)

    out, sq = pl.pallas_call(
        _fused_diffusion_kernel,
        out_shape=(jax.ShapeDtypeStruct((B, C, N), jnp.float32),
                   jax.ShapeDtypeStruct((B, 1, 1), jnp.float32)),
        grid=(B, NT),
        in_specs=[
            pl.BlockSpec(memory_space=pltpu.MemorySpace.SMEM),        # a_t
            pl.BlockSpec(memory_space=pltpu.MemorySpace.SMEM),        # s_t
            pl.BlockSpec((1, C, TN), lambda b, n: (b, 0, n)),         # x_start (bf16)
            pl.BlockSpec((1, C, TN), lambda b, n: (b, 0, n)),         # noise   (bf16)
            pl.BlockSpec((1, C, TN), lambda b, n: (b, 0, n)),         # cond    (bf16)
            pl.BlockSpec((Hd, 2 * C), lambda b, n: (0, 0)),           # w1 (concat-fused)
            pl.BlockSpec((1, Hd, 1), lambda b, n: (b, 0, 0)),         # temb (+ b1)
            pl.BlockSpec((C, Hd), lambda b, n: (0, 0)),               # w2
            pl.BlockSpec((C, 1), lambda b, n: (0, 0)),                # b2
        ],
        out_specs=(pl.BlockSpec((1, C, TN), lambda b, n: (b, 0, n)),  # model output
                   pl.BlockSpec((1, 1, 1), lambda b, n: (b, 0, 0))),  # per-batch sq-err
        scratch_shapes=[pltpu.VMEM((2 * C, TN), jnp.float32)],        # packed concat slab
        compiler_params=pltpu.CompilerParams(
            dimension_semantics=("parallel", "arbitrary")),
    )(a_t, s_t, xb, nb, cb,
      params["w1"], temb, params["w2"], params["b2"])

    # F.mse_loss(output, target), default 'mean' reduction
    loss = jnp.sum(sq) / (B * C * N)
    # TODO(synk): psnr / ssim_3d / nrmsd metrics use helpers not defined in the
    # reference source; omitted here.
    return loss, out


# ------------------------------ pure-JAX reference ---------------------------
def reference(params, buffers, x_start, t, cond, noise):
    x_start = x_start.astype(jnp.float32)
    cond = cond.astype(jnp.float32)
    noise = noise.astype(jnp.float32)
    B, C, N = x_start.shape
    Hd = params["w1"].shape[0]
    a_t = buffers["sqrt_alphas_cumprod"][t][:, None, None]
    s_t = buffers["sqrt_one_minus_alphas_cumprod"][t][:, None, None]
    x_noisy = a_t * x_start + s_t * noise

    half = Hd // 2
    freqs = jnp.exp(-math.log(10000.0) *
                    jnp.arange(half, dtype=jnp.float32) / half)
    args = t.astype(jnp.float32)[:, None] * freqs[None, :]
    temb = jnp.concatenate([jnp.sin(args), jnp.cos(args)], axis=-1)
    temb = (temb @ params["w_t"] + params["b_t"] + params["b1"])[:, :, None]

    xc = jnp.concatenate([x_noisy, cond], axis=1)                 # (B, 2C, N)
    h = jnp.einsum('hk,bkn->bhn', params["w1"], xc) + temb
    h = h * jax.nn.sigmoid(h)
    out = jnp.einsum('ch,bhn->bcn', params["w2"], h) + params["b2"][None]
    loss = jnp.mean((out - noise) ** 2)
    return loss, out


# ---------------------------------- main -------------------------------------
if __name__ == "__main__":
    key = jax.random.PRNGKey(0)
    B, C, D, H, W = 2, 4, 8, 8, 8        # img: (b, c, h, w, d) per forward()
    Hd = 32
    N = D * H * W

    keys = jax.random.split(key, 8)
    img = jax.random.normal(keys[0], (B, C, D, H, W), jnp.float32)
    cond_mr = jax.random.normal(keys[1], (B, C, D, H, W), jnp.float32)
    t = jax.random.randint(keys[2], (B,), 0, TIMESTEPS).astype(jnp.int32)
    noise = jax.random.normal(keys[3], (B, C, D, H, W), jnp.float32)

    params = dict(
        w1=0.1 * jax.random.normal(keys[4], (Hd, 2 * C), jnp.float32),  # concat-fused W1
        b1=jnp.zeros((Hd,), jnp.float32),
        w2=0.1 * jax.random.normal(keys[6], (C, Hd), jnp.float32),
        b2=jnp.zeros((C, 1), jnp.float32),
        w_t=0.1 * jax.random.normal(keys[7], (Hd, Hd), jnp.float32),
        b_t=jnp.zeros((Hd,), jnp.float32),
    )
    buffers = make_diffusion_buffers(TIMESTEPS)

    # flatten spatial -> (B, C, N); activations stored bf16 at the kernel boundary
    xs = img.reshape(B, C, N).astype(jnp.bfloat16)
    cs = cond_mr.reshape(B, C, N).astype(jnp.bfloat16)
    ns = noise.reshape(B, C, N).astype(jnp.bfloat16)

    loss, out = diffusion_forward_loss(params, buffers, xs, t, cs, ns)
    jax.block_until_ready((loss, out))

    loss_ref, out_ref = reference(params, buffers, xs, t, cs, ns)
    assert jnp.allclose(loss, loss_ref, rtol=1e-4, atol=1e-5), (loss, loss_ref)
    assert jnp.allclose(out, out_ref, rtol=1e-4, atol=1e-4)

    print("KERNEL_OK")
</pallas_src>

<mosaic_0001>
module attributes {stable_mosaic.version = 11 : i64} {
  func.func @_fused_diffusion_kernel(%arg0: i32, %arg1: i32, %arg2: memref<2xf32, #tpu.memory_space<smem>>, %arg3: memref<2xf32, #tpu.memory_space<smem>>, %arg4: memref<1x4x512xbf16, #tpu.memory_space<vmem>>, %arg5: memref<1x4x512xbf16, #tpu.memory_space<vmem>>, %arg6: memref<1x4x512xbf16, #tpu.memory_space<vmem>>, %arg7: memref<32x8xf32, #tpu.memory_space<vmem>>, %arg8: memref<1x32x1xf32, #tpu.memory_space<vmem>>, %arg9: memref<4x32xf32, #tpu.memory_space<vmem>>, %arg10: memref<4x1xf32, #tpu.memory_space<vmem>>, %arg11: memref<1x4x512xf32, #tpu.memory_space<vmem>>, %arg12: memref<1x1x1xf32, #tpu.memory_space<vmem>>, %arg13: memref<8x512xf32, #tpu.memory_space<vmem>>) attributes {dimension_semantics = [#tpu.dimension_semantics<parallel>, #tpu.dimension_semantics<arbitrary>], iteration_bounds = array<i64: 2, 1>, scalar_prefetch = 0 : i64, scratch_operands = 1 : i64, tpu.core_type = #tpu.core_type<tc>, window_params = [{transform_indices = @transform_0, window_bounds = array<i64: 2>}, {transform_indices = @transform_1, window_bounds = array<i64: 2>}, {transform_indices = @transform_2, window_bounds = array<i64: 1, 4, 512>}, {transform_indices = @transform_3, window_bounds = array<i64: 1, 4, 512>}, {transform_indices = @transform_4, window_bounds = array<i64: 1, 4, 512>}, {pipeline_mode = #tpu.pipeline_mode<synchronous>, transform_indices = @transform_5, window_bounds = array<i64: 32, 8>}, {transform_indices = @transform_6, window_bounds = array<i64: 1, 32, 1>}, {pipeline_mode = #tpu.pipeline_mode<synchronous>, transform_indices = @transform_7, window_bounds = array<i64: 4, 32>}, {pipeline_mode = #tpu.pipeline_mode<synchronous>, transform_indices = @transform_8, window_bounds = array<i64: 4, 1>}, {transform_indices = @transform_9, window_bounds = array<i64: 1, 4, 512>}, {transform_indices = @transform_10, window_bounds = array<i64: 1, 1, 1>}]} {
    %0 = arith.index_cast %arg0 : i32 to index
    %1 = memref.load %arg2[%0] : memref<2xf32, #tpu.memory_space<smem>>
    %2 = arith.index_cast %arg0 : i32 to index
    %3 = memref.load %arg3[%2] : memref<2xf32, #tpu.memory_space<smem>>
    %c0 = arith.constant 0 : index
    %c0_0 = arith.constant 0 : index
    %c0_1 = arith.constant 0 : index
    %4 = vector.load %arg4[%c0, %c0_0, %c0_1] : memref<1x4x512xbf16, #tpu.memory_space<vmem>>, vector<1x4x512xbf16>
    %5 = vector.shape_cast %4 : vector<1x4x512xbf16> to vector<4x512xbf16>
    %6 = arith.extf %5 : vector<4x512xbf16> to vector<4x512xf32>
    %c0_2 = arith.constant 0 : index
    %c0_3 = arith.constant 0 : index
    %c0_4 = arith.constant 0 : index
    %7 = vector.load %arg5[%c0_2, %c0_3, %c0_4] : memref<1x4x512xbf16, #tpu.memory_space<vmem>>, vector<1x4x512xbf16>
    %8 = vector.shape_cast %7 : vector<1x4x512xbf16> to vector<4x512xbf16>
    %9 = arith.extf %8 : vector<4x512xbf16> to vector<4x512xf32>
    %c0_5 = arith.constant 0 : index
    %c0_6 = arith.constant 0 : index
    %c0_7 = arith.constant 0 : index
    %10 = vector.load %arg6[%c0_5, %c0_6, %c0_7] : memref<1x4x512xbf16, #tpu.memory_space<vmem>>, vector<1x4x512xbf16>
    %11 = vector.shape_cast %10 : vector<1x4x512xbf16> to vector<4x512xbf16>
    %12 = arith.extf %11 : vector<4x512xbf16> to vector<4x512xf32>
    %13 = vector.broadcast %1 : f32 to vector<4x512xf32>
    %14 = arith.mulf %13, %6 : vector<4x512xf32>
    %15 = vector.broadcast %3 : f32 to vector<4x512xf32>
    %16 = arith.mulf %15, %9 : vector<4x512xf32>
    %17 = arith.addf %14, %16 : vector<4x512xf32>
    %c0_8 = arith.constant 0 : index
    %c0_9 = arith.constant 0 : index
    %18 = vector.load %arg13[%c0_8, %c0_9] : memref<8x512xf32, #tpu.memory_space<vmem>>, vector<4x512xf32>
    tpu.vector_store %arg13[%c0_8, %c0_9], %17 {strides = array<i32>} : memref<8x512xf32, #tpu.memory_space<vmem>>, vector<4x512xf32>,
    %c4 = arith.constant 4 : index
    %c0_10 = arith.constant 0 : index
    %19 = vector.load %arg13[%c4, %c0_10] : memref<8x512xf32, #tpu.memory_space<vmem>>, vector<4x512xf32>
    tpu.vector_store %arg13[%c4, %c0_10], %12 {strides = array<i32>} : memref<8x512xf32, #tpu.memory_space<vmem>>, vector<4x512xf32>,
    %c0_11 = arith.constant 0 : index
    %c0_12 = arith.constant 0 : index
    %20 = vector.load %arg7[%c0_11, %c0_12] : memref<32x8xf32, #tpu.memory_space<vmem>>, vector<32x8xf32>
    %c0_13 = arith.constant 0 : index
    %c0_14 = arith.constant 0 : index
    %21 = vector.load %arg13[%c0_13, %c0_14] : memref<8x512xf32, #tpu.memory_space<vmem>>, vector<8x512xf32>
    %cst = arith.constant dense<0.000000e+00> : vector<32x512xf32>
    %22 = tpu.matmul %20, %21, %cst {dimension_numbers = #tpu.dot_dimension_numbers<[1], [0], [0], [1], [0, 0, 1, 1], [], []>} : vector<32x8xf32>, vector<8x512xf32>, vector<32x512xf32> -> vector<32x512xf32>
    %c0_15 = arith.constant 0 : index
    %c0_16 = arith.constant 0 : index
    %c0_17 = arith.constant 0 : index
    %23 = vector.load %arg8[%c0_15, %c0_16, %c0_17] : memref<1x32x1xf32, #tpu.memory_space<vmem>>, vector<1x32x1xf32>
    %24 = vector.shape_cast %23 : vector<1x32x1xf32> to vector<32x1xf32>
    %25 = vector.broadcast %24 : vector<32x1xf32> to vector<32x512xf32>
    %26 = arith.addf %22, %25 : vector<32x512xf32>
    %27 = arith.negf %26 : vector<32x512xf32>
    %28 = math.exp %27 : vector<32x512xf32>
    %cst_18 = arith.constant 1.000000e+00 : f32
    %29 = vector.broadcast %cst_18 : f32 to vector<32x512xf32>
    %30 = arith.addf %29, %28 : vector<32x512xf32>
    %31 = arith.divf %29, %30 : vector<32x512xf32>
    %32 = arith.mulf %26, %31 : vector<32x512xf32>
    %c0_19 = arith.constant 0 : index
    %c0_20 = arith.constant 0 : index
    %33 = vector.load %arg9[%c0_19, %c0_20] : memref<4x32xf32, #tpu.memory_space<vmem>>, vector<4x32xf32>
    %cst_21 = arith.constant dense<0.000000e+00> : vector<4x512xf32>
    %34 = tpu.matmul %33, %32, %cst_21 {dimension_numbers = #tpu.dot_dimension_numbers<[1], [0], [0], [1], [0, 0, 1, 1], [], []>} : vector<4x32xf32>, vector<32x512xf32>, vector<4x512xf32> -> vector<4x512xf32>
    %c0_22 = arith.constant 0 : index
    %c0_23 = arith.constant 0 : index
    %35 = vector.load %arg10[%c0_22, %c0_23] : memref<4x1xf32, #tpu.memory_space<vmem>>, vector<4x1xf32>
    %36 = vector.broadcast %35 : vector<4x1xf32> to vector<4x512xf32>
    %37 = arith.addf %34, %36 : vector<4x512xf32>
    %c0_24 = arith.constant 0 : index
    %c0_25 = arith.constant 0 : index
    %c0_26 = arith.constant 0 : index
    %38 = vector.load %arg11[%c0_24, %c0_25, %c0_26] : memref<1x4x512xf32, #tpu.memory_space<vmem>>, vector<1x4x512xf32>
    %39 = vector.shape_cast %38 : vector<1x4x512xf32> to vector<4x512xf32>
    %40 = vector.shape_cast %37 : vector<4x512xf32> to vector<1x4x512xf32>
    tpu.vector_store %arg11[%c0_24, %c0_25, %c0_26], %40 {strides = array<i32>} : memref<1x4x512xf32, #tpu.memory_space<vmem>>, vector<1x4x512xf32>,
    %41 = arith.subf %37, %9 : vector<4x512xf32>
    %c0_i32 = arith.constant 0 : i32
    %42 = arith.cmpi eq, %arg1, %c0_i32 : i32
    %43 = arith.extui %42 : i1 to i32
    %c0_i32_27 = arith.constant 0 : i32
    %44 = arith.cmpi ne, %43, %c0_i32_27 : i32
    scf.if %44 {
      %cst_35 = arith.constant 0.000000e+00 : f32
      %57 = vector.broadcast %cst_35 : f32 to vector<1x1x1xf32>
      %c0_36 = arith.constant 0 : index
      %c0_37 = arith.constant 0 : index
      %c0_38 = arith.constant 0 : index
      %58 = vector.load %arg12[%c0_36, %c0_37, %c0_38] : memref<1x1x1xf32, #tpu.memory_space<vmem>>, vector<1x1x1xf32>
      tpu.vector_store %arg12[%c0_36, %c0_37, %c0_38], %57 {strides = array<i32>} : memref<1x1x1xf32, #tpu.memory_space<vmem>>, vector<1x1x1xf32>,
    } else {
    }
    %c0_28 = arith.constant 0 : index
    %c0_29 = arith.constant 0 : index
    %c0_30 = arith.constant 0 : index
    %45 = vector.load %arg12[%c0_28, %c0_29, %c0_30] : memref<1x1x1xf32, #tpu.memory_space<vmem>>, vector<1x1x1xf32>
    %46 = vector.shape_cast %45 : vector<1x1x1xf32> to vector<1x1xf32>
    %47 = arith.mulf %41, %41 : vector<4x512xf32>
    %48 = vector.shape_cast %47 : vector<4x512xf32> to vector<1x4x512xf32>
    %cst_31 = arith.constant dense<0.000000e+00> : vector<1xf32>
    %49 = vector.multi_reduction <add>, %48, %cst_31 [1, 2] : vector<1x4x512xf32> to vector<1xf32>
    %50 = vector.shape_cast %49 : vector<1xf32> to vector<1x1x1xf32>
    %51 = vector.extract %50[0, 0, 0] : f32 from vector<1x1x1xf32>
    %52 = vector.broadcast %51 : f32 to vector<1x1xf32>
    %53 = arith.addf %46, %52 : vector<1x1xf32>
    %c0_32 = arith.constant 0 : index
    %c0_33 = arith.constant 0 : index
    %c0_34 = arith.constant 0 : index
    %54 = vector.load %arg12[%c0_32, %c0_33, %c0_34] : memref<1x1x1xf32, #tpu.memory_space<vmem>>, vector<1x1x1xf32>
    %55 = vector.shape_cast %54 : vector<1x1x1xf32> to vector<1x1xf32>
    %56 = vector.shape_cast %53 : vector<1x1xf32> to vector<1x1x1xf32>
    tpu.vector_store %arg12[%c0_32, %c0_33, %c0_34], %56 {strides = array<i32>} : memref<1x1x1xf32, #tpu.memory_space<vmem>>, vector<1x1x1xf32>,
    return
  }
  func.func @transform_0(%arg0: i32, %arg1: i32) -> i32 {
    %c0_i32 = arith.constant 0 : i32
    %c0_i32_0 = arith.constant 0 : i32
    return %c0_i32 : i32
  }
  func.func @transform_1(%arg0: i32, %arg1: i32) -> i32 {
    %c0_i32 = arith.constant 0 : i32
    %c0_i32_0 = arith.constant 0 : i32
    return %c0_i32 : i32
  }
  func.func @transform_2(%arg0: i32, %arg1: i32) -> (i32, i32, i32) {
    %c0_i32 = arith.constant 0 : i32
    %c0_i32_0 = arith.constant 0 : i32
    return %arg0, %c0_i32, %arg1 : i32, i32, i32
  }
  func.func @transform_3(%arg0: i32, %arg1: i32) -> (i32, i32, i32) {
    %c0_i32 = arith.constant 0 : i32
    %c0_i32_0 = arith.constant 0 : i32
    return %arg0, %c0_i32, %arg1 : i32, i32, i32
  }
  func.func @transform_4(%arg0: i32, %arg1: i32) -> (i32, i32, i32) {
    %c0_i32 = arith.constant 0 : i32
    %c0_i32_0 = arith.constant 0 : i32
    return %arg0, %c0_i32, %arg1 : i32, i32, i32
  }
  func.func @transform_5(%arg0: i32, %arg1: i32) -> (i32, i32) {
    %c0_i32 = arith.constant 0 : i32
    %c0_i32_0 = arith.constant 0 : i32
    %c0_i32_1 = arith.constant 0 : i32
    return %c0_i32, %c0_i32_0 : i32, i32
  }
  func.func @transform_6(%arg0: i32, %arg1: i32) -> (i32, i32, i32) {
    %c0_i32 = arith.constant 0 : i32
    %c0_i32_0 = arith.constant 0 : i32
    %c0_i32_1 = arith.constant 0 : i32
    return %arg0, %c0_i32, %c0_i32_0 : i32, i32, i32
  }
  func.func @transform_7(%arg0: i32, %arg1: i32) -> (i32, i32) {
    %c0_i32 = arith.constant 0 : i32
    %c0_i32_0 = arith.constant 0 : i32
    %c0_i32_1 = arith.constant 0 : i32
    return %c0_i32, %c0_i32_0 : i32, i32
  }
  func.func @transform_8(%arg0: i32, %arg1: i32) -> (i32, i32) {
    %c0_i32 = arith.constant 0 : i32
    %c0_i32_0 = arith.constant 0 : i32
    %c0_i32_1 = arith.constant 0 : i32
    return %c0_i32, %c0_i32_0 : i32, i32
  }
  func.func @transform_9(%arg0: i32, %arg1: i32) -> (i32, i32, i32) {
    %c0_i32 = arith.constant 0 : i32
    %c0_i32_0 = arith.constant 0 : i32
    return %arg0, %c0_i32, %arg1 : i32, i32, i32
  }
  func.func @transform_10(%arg0: i32, %arg1: i32) -> (i32, i32, i32) {
    %c0_i32 = arith.constant 0 : i32
    %c0_i32_0 = arith.constant 0 : i32
    %c0_i32_1 = arith.constant 0 : i32
    return %arg0, %c0_i32, %c0_i32_0 : i32, i32, i32
  }
}

</mosaic_0001>

<llo_original>
// kernel: tpu_custom_call.1
$region0: #{tpu_custom_call.1}
  #allocation0 [shape = 'u32[]', space=smem, size = 0x4, offset = 0x4, fixed_abs, tag = 'smem constant byte address 0x4 - core index']
  #allocation1 [shape = 'u32[144,128]{1,0:T(1,128)}', space=vmem, size = 0x12000, scoped, tag = 'internal scratch']
  #allocation2 [shape = 'f32[8,512]{1,0:T(8,128)}', space=vmem, size = 0x4000, scoped, tag = 'scratch operand']
  %s0 = inlined_call_operand.vmem [shape: f32[2], index: 0, kind: input, shape index: {}]
  %s1 = inlined_call_operand.vmem [shape: f32[2], index: 1, kind: input, shape index: {}]
  %s2 = inlined_call_operand.vmem [shape: bf16[2,4,512], index: 2, kind: input, shape index: {}]
  %s3 = inlined_call_operand.vmem [shape: bf16[2,4,512], index: 3, kind: input, shape index: {}]
  %s4 = inlined_call_operand.vmem [shape: bf16[2,4,512], index: 4, kind: input, shape index: {}]
  %s5 = inlined_call_operand.vmem [shape: f32[32,8], index: 5, kind: input, shape index: {}]
  %s6 = inlined_call_operand.vmem [shape: f32[2,32,1], index: 6, kind: input, shape index: {}]
  %s7 = inlined_call_operand.vmem [shape: f32[4,32], index: 7, kind: input, shape index: {}]
  %s8 = inlined_call_operand.vmem [shape: f32[4,1], index: 8, kind: input, shape index: {}]
  %s9 = inlined_call_operand.hbm [shape: f32[2,4,512], index: 9, kind: output, shape index: {0}]
  %s10 = inlined_call_operand.vmem [shape: f32[2,1,1], index: 10, kind: output, shape index: {1}]
  %11 = xla_tuple %s9, %s10
  %s12 = sld [smem:[#allocation0]]
  $region89: #{tpu_custom_call.1} parent=0
    _
  %s14 = ssub.s32 1, %s12
  %s15 = scalar_select 0, %s14, %s12
  $region1: #{tpu_custom_call.1} parent=0
    #allocation3 [shape = 'u8[512]{0}', space=smem, size = 0x200, scoped, tag = 'input window, operand 0, single buffered']
    #allocation4 [shape = 's32[2]{0}', space=sflag, size = 0x8, scoped, tag = 'scoped memory for tpu_custom_call.1']
    #allocation5 [shape = 's32[2]{0}', space=sflag, size = 0x8, scoped, tag = 'scoped memory for tpu_custom_call.1']
    #allocation6 [shape = 'u8[512]{0}', space=smem, size = 0x200, scoped, tag = 'input window, operand 1, single buffered']
    #allocation7 [shape = 's32[1]{0}', space=sflag, size = 0x4, scoped, tag = 'scoped memory for tpu_custom_call.1']
    #allocation8 [shape = 'u8[16384]{0}', space=vmem, size = 0x4000, scoped, tag = 'output window, operand 0']
    %16 = vsyncpa [#allocation5], 0
    %17 = vsyncpa [#allocation7], 0
    %18 = vsyncpa [#allocation4], 0
    %s19 = scalar_lea.sflag [#allocation4], 1
    %20 = vsyncpa %s19, 0
    loop: start=0, step=1, limit=4
    $region2: #{tpu_custom_call.1} parent=1 // loop_pre_header
      _
    $region3: #{tpu_custom_call.1} parent=1 // loop_header
      %s22 = sphi 0, %s26
      %p23 = scmp.ge.s32.totalorder %s22, 4
      %s29 = sphi 0, %s41
      %s30 = sphi 0, %s37
      %s31 = sphi 0, %s29
      %s32 = sphi 0, %s30
      %s33 = sphi 0, %s31
      %s34 = sphi 0, %s32
      %s42 = sphi 0, %s42
      %s44 = sphi 0, %s42
      %s45 = sphi 0, %s44
      %s59 = sphi 0, %s45
      %s63 = sphi 0, %s63
      %s65 = sphi 0, %s63
      %s66 = sphi 0, %s65
      %s80 = sphi 0, %s66
      %s88 = sphi 0, %s90
      %s91 = sphi 0, %s88
      %s92 = sphi 0, %s91
      %s108 = sphi 0, %s92
      %s116 = sphi 0, %s118
      %s119 = sphi 0, %s116
      %s120 = sphi 0, %s119
      %s136 = sphi 0, %s120
      %s144 = sphi 0, %s146
      %s147 = sphi 0, %s144
      %s148 = sphi 0, %s147
      %s164 = sphi 0, %s148
      %s168 = sphi 0, %s168
      %s170 = sphi 0, %s168
      %s171 = sphi 0, %s170
      %s185 = sphi 0, %s171
      %s191 = sphi 0, %s193
      %s194 = sphi 0, %s191
      %s195 = sphi 0, %s194
      %s211 = sphi 0, %s195
      %s215 = sphi 0, %s215
      %s217 = sphi 0, %s215
      %s218 = sphi 0, %s217
      %s232 = sphi 0, %s218
      %s236 = sphi 0, %s236
      %s238 = sphi 0, %s236
      %s239 = sphi 0, %s238
      %s253 = sphi 0, %s239
      %s261 = sphi 0, %s263
      %s264 = sphi 0, %s261
      %s265 = sphi 0, %s264
      %s281 = sphi 0, %s265
      %s287 = sphi 0, %s289
      %s290 = sphi 0, %s287
      %s291 = sphi 0, %s290
      %s307 = sphi 0, %s291
    $region4: #{tpu_custom_call.1} parent=1 // loop_header_branch
      %25 = sbr.rel (%p23) target = $region8
    $region5: #{tpu_custom_call.1} parent=1 // loop_body
      %s27 = ssub.s32 %s22, 1
      %s28 = ssub.s32 %s22, 2
      %s35 = sadd.s32 1, %s30
      %p36 = scmp.ge.s32.totalorder %s35, 1
      %s37 = scalar_select %p36, 0, %s35
      %s38 = sadd.s32 1, %s29
      %s39 = scalar_select %p36, %s38, %s29
      %p40 = scmp.ge.s32.totalorder %s39, 2
      %s41 = scalar_select %p40, 0, %s39
      %s43 = sadd.s32 %s42, 1
      %p46 = scmp.eq.s32.totalorder %s22, 1
      %p47 = scmp.ne.s32.totalorder %s42, %s44
      %p48 = scmp.eq.s32.totalorder %s22, 0
      %p49 = por %p47, %p48
      %p50 = scmp.ne.s32.totalorder %s42, %s44
      %p51 = scmp.eq.s32.totalorder %s27, 1
      %p52 = por %p50, %p51
      %p53 = scmp.ne.s32.totalorder %s44, %s45
      %p54 = scmp.eq.s32.totalorder %s27, 0
      %p55 = por %p53, %p54
      %p56 = scmp.ne.s32.totalorder %s44, %s45
      %p57 = scmp.eq.s32.totalorder %s28, 1
      %p58 = por %p56, %p57
      %p60 = scmp.ne.s32.totalorder %s45, %s59
      %p61 = scmp.eq.s32.totalorder %s28, 0
      %p62 = por %p60, %p61
      %s64 = sadd.s32 %s63, 1
      %p67 = scmp.eq.s32.totalorder %s22, 1
      %p68 = scmp.ne.s32.totalorder %s63, %s65
      %p69 = scmp.eq.s32.totalorder %s22, 0
      %p70 = por %p68, %p69
      %p71 = scmp.ne.s32.totalorder %s63, %s65
      %p72 = scmp.eq.s32.totalorder %s27, 1
      %p73 = por %p71, %p72
      %p74 = scmp.ne.s32.totalorder %s65, %s66
      %p75 = scmp.eq.s32.totalorder %s27, 0
      %p76 = por %p74, %p75
      %p77 = scmp.ne.s32.totalorder %s65, %s66
      %p78 = scmp.eq.s32.totalorder %s28, 1
      %p79 = por %p77, %p78
      %p81 = scmp.ne.s32.totalorder %s66, %s80
      %p82 = scmp.eq.s32.totalorder %s28, 0
      %p83 = por %p81, %p82
      %s84 = ssub.s32 %s29, %s41
      %s85 = ssub.s32 %s30, %s37
      %s86 = sor.u32 %s84, %s85
      %p87 = scmp.eq.s32.totalorder %s86, 0
      %s89 = sadd.s32 %s88, 1
      %s90 = scalar_select %p87, %s88, %s89
      %p93 = pneg %p87
      %p94 = scmp.eq.s32.totalorder %s22, 1
      %p95 = por %p93, %p94
      %p96 = scmp.ne.s32.totalorder %s88, %s91
      %p97 = scmp.eq.s32.totalorder %s22, 0
      %p98 = por %p96, %p97
      %p99 = scmp.ne.s32.totalorder %s88, %s91
      %p100 = scmp.eq.s32.totalorder %s27, 1
      %p101 = por %p99, %p100
      %p102 = scmp.ne.s32.totalorder %s91, %s92
      %p103 = scmp.eq.s32.totalorder %s27, 0
      %p104 = por %p102, %p103
      %p105 = scmp.ne.s32.totalorder %s91, %s92
      %p106 = scmp.eq.s32.totalorder %s28, 1
      %p107 = por %p105, %p106
      %p109 = scmp.ne.s32.totalorder %s92, %s108
      %p110 = scmp.eq.s32.totalorder %s28, 0
      %p111 = por %p109, %p110
      %s112 = ssub.s32 %s29, %s41
      %s113 = ssub.s32 %s30, %s37
      %s114 = sor.u32 %s112, %s113
      %p115 = scmp.eq.s32.totalorder %s114, 0
      %s117 = sadd.s32 %s116, 1
      %s118 = scalar_select %p115, %s116, %s117
      %p121 = pneg %p115
      %p122 = scmp.eq.s32.totalorder %s22, 1
      %p123 = por %p121, %p122
      %p124 = scmp.ne.s32.totalorder %s116, %s119
      %p125 = scmp.eq.s32.totalorder %s22, 0
      %p126 = por %p124, %p125
      %p127 = scmp.ne.s32.totalorder %s116, %s119
      %p128 = scmp.eq.s32.totalorder %s27, 1
      %p129 = por %p127, %p128
      %p130 = scmp.ne.s32.totalorder %s119, %s120
      %p131 = scmp.eq.s32.totalorder %s27, 0
      %p132 = por %p130, %p131
      %p133 = scmp.ne.s32.totalorder %s119, %s120
      %p134 = scmp.eq.s32.totalorder %s28, 1
      %p135 = por %p133, %p134
      %p137 = scmp.ne.s32.totalorder %s120, %s136
      %p138 = scmp.eq.s32.totalorder %s28, 0
      %p139 = por %p137, %p138
      %s140 = ssub.s32 %s29, %s41
      %s141 = ssub.s32 %s30, %s37
      %s142 = sor.u32 %s140, %s141
      %p143 = scmp.eq.s32.totalorder %s142, 0
      %s145 = sadd.s32 %s144, 1
      %s146 = scalar_select %p143, %s144, %s145
      %p149 = pneg %p143
      %p150 = scmp.eq.s32.totalorder %s22, 1
      %p151 = por %p149, %p150
      %p152 = scmp.ne.s32.totalorder %s144, %s147
      %p153 = scmp.eq.s32.totalorder %s22, 0
      %p154 = por %p152, %p153
      %p155 = scmp.ne.s32.totalorder %s144, %s147
      %p156 = scmp.eq.s32.totalorder %s27, 1
      %p157 = por %p155, %p156
      %p158 = scmp.ne.s32.totalorder %s147, %s148
      %p159 = scmp.eq.s32.totalorder %s27, 0
      %p160 = por %p158, %p159
      %p161 = scmp.ne.s32.totalorder %s147, %s148
      %p162 = scmp.eq.s32.totalorder %s28, 1
      %p163 = por %p161, %p162
      %p165 = scmp.ne.s32.totalorder %s148, %s164
      %p166 = scmp.eq.s32.totalorder %s28, 0
      %p167 = por %p165, %p166
      %s169 = sadd.s32 %s168, 1
      %p172 = scmp.eq.s32.totalorder %s22, 1
      %p173 = scmp.ne.s32.totalorder %s168, %s170
      %p174 = scmp.eq.s32.totalorder %s22, 0
      %p175 = por %p173, %p174
      %p176 = scmp.ne.s32.totalorder %s168, %s170
      %p177 = scmp.eq.s32.totalorder %s27, 1
      %p178 = por %p176, %p177
      %p179 = scmp.ne.s32.totalorder %s170, %s171
      %p180 = scmp.eq.s32.totalorder %s27, 0
      %p181 = por %p179, %p180
      %p182 = scmp.ne.s32.totalorder %s170, %s171
      %p183 = scmp.eq.s32.totalorder %s28, 1
      %p184 = por %p182, %p183
      %p186 = scmp.ne.s32.totalorder %s171, %s185
      %p187 = scmp.eq.s32.totalorder %s28, 0
      %p188 = por %p186, %p187
      %s189 = ssub.s32 %s29, %s41
      %p190 = scmp.eq.s32.totalorder %s189, 0
      %s192 = sadd.s32 %s191, 1
      %s193 = scalar_select %p190, %s191, %s192
      %p196 = pneg %p190
      %p197 = scmp.eq.s32.totalorder %s22, 1
      %p198 = por %p196, %p197
      %p199 = scmp.ne.s32.totalorder %s191, %s194
      %p200 = scmp.eq.s32.totalorder %s22, 0
      %p201 = por %p199, %p200
      %p202 = scmp.ne.s32.totalorder %s191, %s194
      %p203 = scmp.eq.s32.totalorder %s27, 1
      %p204 = por %p202, %p203
      %p205 = scmp.ne.s32.totalorder %s194, %s195
      %p206 = scmp.eq.s32.totalorder %s27, 0
      %p207 = por %p205, %p206
      %p208 = scmp.ne.s32.totalorder %s194, %s195
      %p209 = scmp.eq.s32.totalorder %s28, 1
      %p210 = por %p208, %p209
      %p212 = scmp.ne.s32.totalorder %s195, %s211
      %p213 = scmp.eq.s32.totalorder %s28, 0
      %p214 = por %p212, %p213
      %s216 = sadd.s32 %s215, 1
      %p219 = scmp.eq.s32.totalorder %s22, 1
      %p220 = scmp.ne.s32.totalorder %s215, %s217
      %p221 = scmp.eq.s32.totalorder %s22, 0
      %p222 = por %p220, %p221
      %p223 = scmp.ne.s32.totalorder %s215, %s217
      %p224 = scmp.eq.s32.totalorder %s27, 1
      %p225 = por %p223, %p224
      %p226 = scmp.ne.s32.totalorder %s217, %s218
      %p227 = scmp.eq.s32.totalorder %s27, 0
      %p228 = por %p226, %p227
      %p229 = scmp.ne.s32.totalorder %s217, %s218
      %p230 = scmp.eq.s32.totalorder %s28, 1
      %p231 = por %p229, %p230
      %p233 = scmp.ne.s32.totalorder %s218, %s232
      %p234 = scmp.eq.s32.totalorder %s28, 0
      %p235 = por %p233, %p234
      %s237 = sadd.s32 %s236, 1
      %p240 = scmp.eq.s32.totalorder %s22, 1
      %p241 = scmp.ne.s32.totalorder %s236, %s238
      %p242 = scmp.eq.s32.totalorder %s22, 0
      %p243 = por %p241, %p242
      %p244 = scmp.ne.s32.totalorder %s236, %s238
      %p245 = scmp.eq.s32.totalorder %s27, 1
      %p246 = por %p244, %p245
      %p247 = scmp.ne.s32.totalorder %s238, %s239
      %p248 = scmp.eq.s32.totalorder %s27, 0
      %p249 = por %p247, %p248
      %p250 = scmp.ne.s32.totalorder %s238, %s239
      %p251 = scmp.eq.s32.totalorder %s28, 1
      %p252 = por %p250, %p251
      %p254 = scmp.ne.s32.totalorder %s239, %s253
      %p255 = scmp.eq.s32.totalorder %s28, 0
      %p256 = por %p254, %p255
      %s257 = ssub.s32 %s29, %s41
      %s258 = ssub.s32 %s30, %s37
      %s259 = sor.u32 %s257, %s258
      %p260 = scmp.eq.s32.totalorder %s259, 0
      %s262 = sadd.s32 %s261, 1
      %s263 = scalar_select %p260, %s261, %s262
      %p266 = pneg %p260
      %p267 = scmp.eq.s32.totalorder %s22, 1
      %p268 = por %p266, %p267
      %p269 = scmp.ne.s32.totalorder %s261, %s264
      %p270 = scmp.eq.s32.totalorder %s22, 0
      %p271 = por %p269, %p270
      %p272 = scmp.ne.s32.totalorder %s261, %s264
      %p273 = scmp.eq.s32.totalorder %s27, 1
      %p274 = por %p272, %p273
      %p275 = scmp.ne.s32.totalorder %s264, %s265
      %p276 = scmp.eq.s32.totalorder %s27, 0
      %p277 = por %p275, %p276
      %p278 = scmp.ne.s32.totalorder %s264, %s265
      %p279 = scmp.eq.s32.totalorder %s28, 1
      %p280 = por %p278, %p279
      %p282 = scmp.ne.s32.totalorder %s265, %s281
      %p283 = scmp.eq.s32.totalorder %s28, 0
      %p284 = por %p282, %p283
      %s285 = ssub.s32 %s29, %s41
      %p286 = scmp.eq.s32.totalorder %s285, 0
      %s288 = sadd.s32 %s287, 1
      %s289 = scalar_select %p286, %s287, %s288
      %p292 = pneg %p286
      %p293 = scmp.eq.s32.totalorder %s22, 1
      %p294 = por %p292, %p293
      %p295 = scmp.ne.s32.totalorder %s287, %s290
      %p296 = scmp.eq.s32.totalorder %s22, 0
      %p297 = por %p295, %p296
      %p298 = scmp.ne.s32.totalorder %s287, %s290
      %p299 = scmp.eq.s32.totalorder %s27, 1
      %p300 = por %p298, %p299
      %p301 = scmp.ne.s32.totalorder %s290, %s291
      %p302 = scmp.eq.s32.totalorder %s27, 0
      %p303 = por %p301, %p302
      %p304 = scmp.ne.s32.totalorder %s290, %s291
      %p305 = scmp.eq.s32.totalorder %s28, 1
      %p306 = por %p304, %p305
      %p308 = scmp.ne.s32.totalorder %s291, %s307
      %p309 = scmp.eq.s32.totalorder %s28, 0
      %p310 = por %p308, %p309
      %p311 = scmp.le.s32.totalorder 1, %s22
      %p312 = scmp.lt.s32.totalorder %s22, 3
      %p313 = pnand %p311, %p312
      %p314 = pneg %p313
      // Predicated region
      $region9: #{tpu_custom_call.1} parent=5 // pred_check
        _
      $region10: #{tpu_custom_call.1} parent=5 // pred_check_branch
        %316 = sbr.rel (%p313) target = $region12
      $region11: #{tpu_custom_call.1} parent=5 // pred_region
        %s317 = ssub.s32 %s22, 1
        // Predicated region
        $region13: #{tpu_custom_call.1} parent=11 // pred_check
          %p318 = pneg %p55
        $region14: #{tpu_custom_call.1} parent=11 // pred_check_branch
          %320 = sbr.rel (%p318) target = $region16
        $region15: #{tpu_custom_call.1} parent=11 // pred_region
          %s322 = ssub.s32 16, 16
          %323 = vsyncadd [#allocation5], %s322
          %s325 = sshll.u32 %s0, 4
          %s326 = int_to_ptr.vmem [resolvable:$true] %s325
          %328 = dma.vmem_to_smem %s326, 16, [#allocation3], [#allocation5]
        $region16: #{tpu_custom_call.1} parent=11 // pred_fallthru
          _
        // Predicated region
        $region17: #{tpu_custom_call.1} parent=11 // pred_check
          %p329 = pneg %p76
        $region18: #{tpu_custom_call.1} parent=11 // pred_check_branch
          %331 = sbr.rel (%p329) target = $region20
        $region19: #{tpu_custom_call.1} parent=11 // pred_region
          %s333 = ssub.s32 16, 16
          %334 = vsyncadd [#allocation7], %s333
          %s336 = sshll.u32 %s1, 4
          %s337 = int_to_ptr.vmem [resolvable:$true] %s336
          %339 = dma.vmem_to_smem %s337, 16, [#allocation6], [#allocation7]
        $region20: #{tpu_custom_call.1} parent=11 // pred_fallthru
          _
        // Predicated region
        $region21: #{tpu_custom_call.1} parent=11 // pred_check
          %p340 = pneg %p181
        $region22: #{tpu_custom_call.1} parent=11 // pred_check_branch
          %342 = sbr.rel (%p340) target = $region24
        $region23: #{tpu_custom_call.1} parent=11 // pred_region
          _
        $region24: #{tpu_custom_call.1} parent=11 // pred_fallthru
          _
        // Predicated region
        $region25: #{tpu_custom_call.1} parent=11 // pred_check
          %p343 = pneg %p228
        $region26: #{tpu_custom_call.1} parent=11 // pred_check_branch
          %345 = sbr.rel (%p343) target = $region28
        $region27: #{tpu_custom_call.1} parent=11 // pred_region
          _
        $region28: #{tpu_custom_call.1} parent=11 // pred_fallthru
          _
        // Predicated region
        $region29: #{tpu_custom_call.1} parent=11 // pred_check
          %p346 = pneg %p249
        $region30: #{tpu_custom_call.1} parent=11 // pred_check_branch
          %348 = sbr.rel (%p346) target = $region32
        $region31: #{tpu_custom_call.1} parent=11 // pred_region
          _
        $region32: #{tpu_custom_call.1} parent=11 // pred_fallthru
          _
      $region12: #{tpu_custom_call.1} parent=5 // pred_fallthru
        _
      %p349 = scmp.lt.s32.totalorder %s22, 2
      // Predicated region
      $region33: #{tpu_custom_call.1} parent=5 // pred_check
        %p350 = pneg %p349
      $region34: #{tpu_custom_call.1} parent=5 // pred_check_branch
        %352 = sbr.rel (%p350) target = $region36
      $region35: #{tpu_custom_call.1} parent=5 // pred_region
        // Predicated region
        $region37: #{tpu_custom_call.1} parent=35 // pred_check
          %p353 = pneg %p98
        $region38: #{tpu_custom_call.1} parent=35 // pred_check_branch
          %355 = sbr.rel (%p353) target = $region40
        $region39: #{tpu_custom_call.1} parent=35 // pred_region
          %s356 = smul.u32 4, %s30
          %p357 = scmp.lt.s32.totalorder %s29, 1
          %s358 = scalar_select %p357, %s29, 1
          %p359 = scmp.lt.s32.totalorder %s356, 3
          %s360 = scalar_select %p359, %s356, 3
          %s361 = smul.addr %s358, 4
          %s362 = sadd.s32 %s360, %s361
          %s363 = smul.addr %s362, 2
          %s364 = scalar_lea.vmem %s2, %s363
          %s365 = smul.u32 4, %s30
        $region40: #{tpu_custom_call.1} parent=35 // pred_fallthru
          _
        // Predicated region
        $region41: #{tpu_custom_call.1} parent=35 // pred_check
          %p366 = pneg %p126
        $region42: #{tpu_custom_call.1} parent=35 // pred_check_branch
          %368 = sbr.rel (%p366) target = $region44
        $region43: #{tpu_custom_call.1} parent=35 // pred_region
          %s369 = smul.u32 4, %s30
          %p370 = scmp.lt.s32.totalorder %s29, 1
          %s371 = scalar_select %p370, %s29, 1
          %p372 = scmp.lt.s32.totalorder %s369, 3
          %s373 = scalar_select %p372, %s369, 3
          %s374 = smul.addr %s371, 4
          %s375 = sadd.s32 %s373, %s374
          %s376 = smul.addr %s375, 2
          %s377 = scalar_lea.vmem %s3, %s376
          %s378 = smul.u32 4, %s30
        $region44: #{tpu_custom_call.1} parent=35 // pred_fallthru
          _
        // Predicated region
        $region45: #{tpu_custom_call.1} parent=35 // pred_check
          %p379 = pneg %p154
        $region46: #{tpu_custom_call.1} parent=35 // pred_check_branch
          %381 = sbr.rel (%p379) target = $region48
        $region47: #{tpu_custom_call.1} parent=35 // pred_region
          %s382 = smul.u32 4, %s30
          %p383 = scmp.lt.s32.totalorder %s29, 1
          %s384 = scalar_select %p383, %s29, 1
          %p385 = scmp.lt.s32.totalorder %s382, 3
          %s386 = scalar_select %p385, %s382, 3
          %s387 = smul.addr %s384, 4
          %s388 = sadd.s32 %s386, %s387
          %s389 = smul.addr %s388, 2
          %s390 = scalar_lea.vmem %s4, %s389
          %s391 = smul.u32 4, %s30
        $region48: #{tpu_custom_call.1} parent=35 // pred_fallthru
          _
        // Predicated region
        $region49: #{tpu_custom_call.1} parent=35 // pred_check
          %p392 = pneg %p201
        $region50: #{tpu_custom_call.1} parent=35 // pred_check_branch
          %394 = sbr.rel (%p392) target = $region52
        $region51: #{tpu_custom_call.1} parent=35 // pred_region
          %p395 = scmp.lt.s32.totalorder %s29, 1
          %s396 = scalar_select %p395, %s29, 1
          %s397 = smul.addr %s396, 4
          %s398 = smul.addr %s397, 8
          %s399 = scalar_lea.vmem %s6, %s398
        $region52: #{tpu_custom_call.1} parent=35 // pred_fallthru
          _
      $region36: #{tpu_custom_call.1} parent=5 // pred_fallthru
        _
      %p400 = scmp.le.s32.totalorder 1, %s22
      %p401 = scmp.lt.s32.totalorder %s22, 3
      %p402 = pnand %p400, %p401
      %p403 = pneg %p402
      // Predicated region
      $region53: #{tpu_custom_call.1} parent=5 // pred_check
        _
      $region54: #{tpu_custom_call.1} parent=5 // pred_check_branch
        %405 = sbr.rel (%p402) target = $region56
      $region55: #{tpu_custom_call.1} parent=5 // pred_region
        %s406 = ssub.s32 %s22, 1
        // Predicated region
        $region57: #{tpu_custom_call.1} parent=55 // pred_check
          %p407 = pneg %p55
        $region58: #{tpu_custom_call.1} parent=55 // pred_check_branch
          %409 = sbr.rel (%p407) target = $region60
        $region59: #{tpu_custom_call.1} parent=55 // pred_region
          %410 = dma.done [#allocation5], 16
        $region60: #{tpu_custom_call.1} parent=55 // pred_fallthru
          _
        // Predicated region
        $region61: #{tpu_custom_call.1} parent=55 // pred_check
          %p411 = pneg %p76
        $region62: #{tpu_custom_call.1} parent=55 // pred_check_branch
          %413 = sbr.rel (%p411) target = $region64
        $region63: #{tpu_custom_call.1} parent=55 // pred_region
          %414 = dma.done [#allocation7], 16
        $region64: #{tpu_custom_call.1} parent=55 // pred_fallthru
          _
        %415 = sfence
        %p416 = pneg %p55
        %p417 = pneg %p52
        %p418 = pneg %p76
        %p419 = pneg %p73
        %s420 = smul.u32 4, %s32
        %p421 = scmp.lt.s32.totalorder %s31, 1
        %s422 = scalar_select %p421, %s31, 1
        %p423 = scmp.lt.s32.totalorder %s420, 3
        %s424 = scalar_select %p423, %s420, 3
        %s425 = smul.addr %s422, 4
        %s426 = sadd.s32 %s424, %s425
        %s427 = smul.addr %s426, 2
        %s428 = scalar_lea.vmem %s2, %s427
        %p429 = pneg %p104
        %p430 = pneg %p101
        %s431 = smul.u32 4, %s32
        %p432 = scmp.lt.s32.totalorder %s31, 1
        %s433 = scalar_select %p432, %s31, 1
        %p434 = scmp.lt.s32.totalorder %s431, 3
        %s435 = scalar_select %p434, %s431, 3
        %s436 = smul.addr %s433, 4
        %s437 = sadd.s32 %s435, %s436
        %s438 = smul.addr %s437, 2
        %s439 = scalar_lea.vmem %s3, %s438
        %p440 = pneg %p132
        %p441 = pneg %p129
        %s442 = smul.u32 4, %s32
        %p443 = scmp.lt.s32.totalorder %s31, 1
        %s444 = scalar_select %p443, %s31, 1
        %p445 = scmp.lt.s32.totalorder %s442, 3
        %s446 = scalar_select %p445, %s442, 3
        %s447 = smul.addr %s444, 4
        %s448 = sadd.s32 %s446, %s447
        %s449 = smul.addr %s448, 2
        %s450 = scalar_lea.vmem %s4, %s449
        %p451 = pneg %p160
        %p452 = pneg %p157
        %p453 = pneg %p181
        %p454 = pneg %p178
        %p455 = scmp.lt.s32.totalorder %s31, 1
        %s456 = scalar_select %p455, %s31, 1
        %s457 = smul.addr %s456, 4
        %s458 = smul.addr %s457, 8
        %s459 = scalar_lea.vmem %s6, %s458
        %p460 = pneg %p207
        %p461 = pneg %p204
        %p462 = pneg %p228
        %p463 = pneg %p225
        %p464 = pneg %p249
        %p465 = pneg %p246
        %p466 = pneg %p277
        %p467 = pneg %p274
        %s468 = sand.u32 %s264, 1
        %s469 = scalar_lea.sflag [#allocation4], %s468
        %s470 = sand.u32 %s264, 1
        %s471 = smul.addr %s470, 16
        %s472 = scalar_lea.vmem [#allocation8], %s471
        %p473 = pneg %p303
        %p474 = pneg %p300
        %p475 = scmp.lt.s32.totalorder %s31, 1
        %s476 = scalar_select %p475, %s31, 1
        %s477 = scalar_lea.vmem %s10, %s476
        %s478 = smul.u32 4, %s32
        %p479 = scmp.lt.s32.totalorder %s31, 1
        %s480 = scalar_select %p479, %s31, 1
        %p481 = scmp.lt.s32.totalorder %s478, 3
        %s482 = scalar_select %p481, %s478, 3
        %s483 = smul.addr %s480, 4
        %s484 = sadd.s32 %s482, %s483
        %s485 = smul.addr %s484, 2
        %s486 = scalar_lea.vmem %s2, %s485
        %s487 = smul.u32 4, %s32
        %s488 = smul.u32 4, %s32
        %p489 = scmp.lt.s32.totalorder %s31, 1
        %s490 = scalar_select %p489, %s31, 1
        %p491 = scmp.lt.s32.totalorder %s488, 3
        %s492 = scalar_select %p491, %s488, 3
        %s493 = smul.addr %s490, 4
        %s494 = sadd.s32 %s492, %s493
        %s495 = smul.addr %s494, 2
        %s496 = scalar_lea.vmem %s3, %s495
        %s497 = smul.u32 4, %s32
        %s498 = smul.u32 4, %s32
        %p499 = scmp.lt.s32.totalorder %s31, 1
        %s500 = scalar_select %p499, %s31, 1
        %p501 = scmp.lt.s32.totalorder %s498, 3
        %s502 = scalar_select %p501, %s498, 3
        %s503 = smul.addr %s500, 4
        %s504 = sadd.s32 %s502, %s503
        %s505 = smul.addr %s504, 2
        %s506 = scalar_lea.vmem %s4, %s505
        %s507 = smul.u32 4, %s32
        %p508 = scmp.lt.s32.totalorder %s31, 1
        %s509 = scalar_select %p508, %s31, 1
        %s510 = smul.addr %s509, 4
        %s511 = smul.addr %s510, 8
        %s512 = scalar_lea.vmem %s6, %s511
        %s513 = smul.u32 4, %s32
        %p514 = scmp.lt.s32.totalorder %s31, 1
        %s515 = scalar_select %p514, %s31, 1
        %s516 = scalar_lea.vmem %s10, %s515
        %s517 = sld [smem:[#allocation3 + %s31]]
        %s518 = sld [smem:[#allocation6 + %s31]]
        %v519 = vld [vmem:[%s486] sm:$0xff]
        %v520 = vunpack.c.l.bf16 %v519
        %v521 = vunpack.c.h.bf16 %v519
        %v522 = vld [vmem:[%s496] sm:$0xff]
        %v523 = vunpack.c.l.bf16 %v522
        %v524 = vunpack.c.h.bf16 %v522
        %v525 = vld [vmem:[%s506] sm:$0xff]
        %v526 = vunpack.c.l.bf16 %v525
        %v527 = vunpack.c.h.bf16 %v525
        %v528 = vstv %s517
        %v529 = vmul.f32 %v528, %v520
        %v530 = vmul.f32 %v528, %v521
        %v531 = vstv %s518
        %v532 = vmul.f32 %v531, %v523
        %v533 = vmul.f32 %v531, %v524
        %v534 = vadd.f32 %v529, %v532
        %v535 = vadd.f32 %v530, %v533
        %v538 = vcombine.high %v534, %v534
        %v539 = vcombine.high %v535, %v535
        %542 = vst [vmem:[#allocation2] sm:$0xf] %v534
        %543 = vst [vmem:[#allocation2 + $0x8] sm:$0xf] %v538
        %544 = vst [vmem:[#allocation2 + $0x10] sm:$0xf] %v535
        %545 = vst [vmem:[#allocation2 + $0x18] sm:$0xf] %v539
        %v548 = vcombine.low %v526, %v526
        %v549 = vcombine.low %v527, %v527
        %552 = vst [vmem:[#allocation2] sm:$0xf0] %v548
        %553 = vst [vmem:[#allocation2 + $0x8] sm:$0xf0] %v526
        %554 = vst [vmem:[#allocation2 + $0x10] sm:$0xf0] %v549
        %555 = vst [vmem:[#allocation2 + $0x18] sm:$0xf0] %v527
        %v556 = vld [vmem:[%s5] sm:$0xff]
        %v557 = vld [vmem:[%s5 + $0x8] sm:$0xff]
        %v558 = vld [vmem:[%s5 + $0x10] sm:$0xff]
        %v559 = vld [vmem:[%s5 + $0x18] sm:$0xff]
        %v560 = vld [vmem:[#allocation2] sm:$0xff]
        %v561 = vld [vmem:[#allocation2 + $0x8] sm:$0xff]
        %v562 = vld [vmem:[#allocation2 + $0x10] sm:$0xff]
        %v563 = vld [vmem:[#allocation2 + $0x18] sm:$0xff]
        %v564 = vld [vmem:[%s512] sm:$0xff]
        %v565 = vld [vmem:[%s512 + $0x8] sm:$0xff]
        %v566 = vld [vmem:[%s512 + $0x10] sm:$0xff]
        %v567 = vld [vmem:[%s512 + $0x18] sm:$0xff]
        %569 = vset.pattern.permute.xlu0 0
        %570 = vperm.xlu0 %569, %v564
        %v571 = vpop.permute.xlu0 %570
        %574 = vset.pattern.permute.xlu0 0
        %575 = vperm.xlu0 %574, %v565
        %v576 = vpop.permute.xlu0 %575
        %579 = vset.pattern.permute.xlu0 0
        %580 = vperm.xlu0 %579, %v566
        %v581 = vpop.permute.xlu0 %580
        %584 = vset.pattern.permute.xlu0 0
        %585 = vperm.xlu0 %584, %v567
        %v586 = vpop.permute.xlu0 %585
        %vm588 = vcmask 64512
        %v590 = vsel %vm588, %v556, 0
        %v593 = vsel %vm588, %v557, 0
        %v596 = vsel %vm588, %v558, 0
        %v599 = vsel %vm588, %v559, 0
        %601 = vmatprep.subr.mxu0 0.0
        %602 = vmatpush1.msra.mxu0 0.0
        %603 = vmatprep.subr.mxu0 0.0
        %604 = vmatpush1.msra.mxu0 0.0
        %605 = vmatprep.subr.mxu0 0.0
        %606 = vmatpush1.msra.mxu0 0.0
        %607 = vmatprep.subr.mxu0 0.0
        %608 = vmatpush1.msra.mxu0 0.0
        %609 = vmatprep.subr.mxu0 0.0
        %610 = vmatpush1.msra.mxu0 0.0
        %611 = vmatprep.subr.mxu0 0.0
        %612 = vmatpush1.msra.mxu0 0.0
        %613 = vmatprep.subr.mxu0 0.0
        %614 = vmatpush1.msra.mxu0 0.0
        %615 = vmatprep.subr.mxu0 0.0
        %616 = vmatpush1.msra.mxu0 0.0
        %617 = vmatprep.subr.mxu0 0.0
        %618 = vmatpush1.msra.mxu0 0.0
        %619 = vmatprep.subr.mxu0 0.0
        %620 = vmatpush1.msra.mxu0 0.0
        %621 = vmatprep.subr.mxu0 0.0
        %622 = vmatpush1.msra.mxu0 0.0
        %623 = vmatprep.subr.mxu0 0.0
        %624 = vmatpush1.msra.mxu0 0.0
        %625 = vmatprep.subr.mxu0 0.0
        %626 = vmatpush1.msra.mxu0 0.0
        %627 = vmatprep.subr.mxu0 0.0
        %628 = vmatpush1.msra.mxu0 0.0
        %629 = vmatprep.subr.mxu0 0.0
        %630 = vmatpush1.msra.mxu0 0.0
        %631 = vmatprep.subr.mxu0 %v561
        %632 = vmatpush1.msra.mxu0 %v560
        %633 = vmatprep.subr.mxu0 0.0
        %634 = vmatpush2.msra.mxu0 0.0
        %635 = vmatprep.subr.mxu0 0.0
        %636 = vmatpush2.msra.mxu0 0.0
        %637 = vmatprep.subr.mxu0 0.0
        %638 = vmatpush2.msra.mxu0 0.0
        %639 = vmatprep.subr.mxu0 0.0
        %640 = vmatpush2.msra.mxu0 0.0
        %641 = vmatprep.subr.mxu0 0.0
        %642 = vmatpush2.msra.mxu0 0.0
        %643 = vmatprep.subr.mxu0 0.0
        %644 = vmatpush2.msra.mxu0 0.0
        %645 = vmatprep.subr.mxu0 0.0
        %646 = vmatpush2.msra.mxu0 0.0
        %647 = vmatprep.subr.mxu0 0.0
        %648 = vmatpush2.msra.mxu0 0.0
        %649 = vmatprep.subr.mxu0 0.0
        %650 = vmatpush2.msra.mxu0 0.0
        %651 = vmatprep.subr.mxu0 0.0
        %652 = vmatpush2.msra.mxu0 0.0
        %653 = vmatprep.subr.mxu0 0.0
        %654 = vmatpush2.msra.mxu0 0.0
        %655 = vmatprep.subr.mxu0 0.0
        %656 = vmatpush2.msra.mxu0 0.0
        %657 = vmatprep.subr.mxu0 0.0
        %658 = vmatpush2.msra.mxu0 0.0
        %659 = vmatprep.subr.mxu0 0.0
        %660 = vmatpush2.msra.mxu0 0.0
        %661 = vmatprep.subr.mxu0 0.0
        %662 = vmatpush2.msra.mxu0 0.0
        %663 = vmatprep.subr.mxu0 0.0
        %664 = vmatpush2.msra.mxu0 0.0
        %665 = vmatprep.mubr.f32.mxu0 0.0
        %666 = vmatmul.mubr.f32.gmra.mxu0 %v590
        %v667 = vpop.f32.mrf.mxu0
        %v668 = vadd.f32 %v571, %v667
        %v669 = vpop.f32.mrf.mxu0
        %v670 = vadd.f32 %v571, %v669
        %671 = vmatprep.mubr.f32.mxu0 0.0
        %672 = vmatmul.mubr.f32.gmra.mxu0 %v593
        %v673 = vpop.f32.mrf.mxu0
        %v674 = vadd.f32 %v576, %v673
        %v675 = vpop.f32.mrf.mxu0
        %v676 = vadd.f32 %v576, %v675
        %677 = vmatprep.mubr.f32.mxu0 0.0
        %678 = vmatmul.mubr.f32.gmra.mxu0 %v596
        %v679 = vpop.f32.mrf.mxu0
        %v680 = vadd.f32 %v581, %v679
        %v681 = vpop.f32.mrf.mxu0
        %v682 = vadd.f32 %v581, %v681
        %683 = vmatprep.mubr.f32.mxu0 0.0
        %684 = vmatmul.mubr.f32.gmra.mxu0 %v599
        %v685 = vpop.f32.mrf.mxu0
        %v686 = vadd.f32 %v586, %v685
        %v687 = vpop.f32.mrf.mxu0
        %v688 = vadd.f32 %v586, %v687
        %689 = vdwg.mxu0
        %690 = vmatprep.subr.mxu0 0.0
        %691 = vmatpush1.msra.mxu0 0.0
        %692 = vmatprep.subr.mxu0 0.0
        %693 = vmatpush1.msra.mxu0 0.0
        %694 = vmatprep.subr.mxu0 0.0
        %695 = vmatpush1.msra.mxu0 0.0
        %696 = vmatprep.subr.mxu0 0.0
        %697 = vmatpush1.msra.mxu0 0.0
        %698 = vmatprep.subr.mxu0 0.0
        %699 = vmatpush1.msra.mxu0 0.0
        %700 = vmatprep.subr.mxu0 0.0
        %701 = vmatpush1.msra.mxu0 0.0
        %702 = vmatprep.subr.mxu0 0.0
        %703 = vmatpush1.msra.mxu0 0.0
        %704 = vmatprep.subr.mxu0 0.0
        %705 = vmatpush1.msra.mxu0 0.0
        %706 = vmatprep.subr.mxu0 0.0
        %707 = vmatpush1.msra.mxu0 0.0
        %708 = vmatprep.subr.mxu0 0.0
        %709 = vmatpush1.msra.mxu0 0.0
        %710 = vmatprep.subr.mxu0 0.0
        %711 = vmatpush1.msra.mxu0 0.0
        %712 = vmatprep.subr.mxu0 0.0
        %713 = vmatpush1.msra.mxu0 0.0
        %714 = vmatprep.subr.mxu0 0.0
        %715 = vmatpush1.msra.mxu0 0.0
        %716 = vmatprep.subr.mxu0 0.0
        %717 = vmatpush1.msra.mxu0 0.0
        %718 = vmatprep.subr.mxu0 0.0
        %719 = vmatpush1.msra.mxu0 0.0
        %720 = vmatprep.subr.mxu0 %v563
        %721 = vmatpush1.msra.mxu0 %v562
        %722 = vmatprep.subr.mxu0 0.0
        %723 = vmatpush2.msra.mxu0 0.0
        %724 = vmatprep.subr.mxu0 0.0
        %725 = vmatpush2.msra.mxu0 0.0
        %726 = vmatprep.subr.mxu0 0.0
        %727 = vmatpush2.msra.mxu0 0.0
        %728 = vmatprep.subr.mxu0 0.0
        %729 = vmatpush2.msra.mxu0 0.0
        %730 = vmatprep.subr.mxu0 0.0
        %731 = vmatpush2.msra.mxu0 0.0
        %732 = vmatprep.subr.mxu0 0.0
        %733 = vmatpush2.msra.mxu0 0.0
        %734 = vmatprep.subr.mxu0 0.0
        %735 = vmatpush2.msra.mxu0 0.0
        %736 = vmatprep.subr.mxu0 0.0
        %737 = vmatpush2.msra.mxu0 0.0
        %738 = vmatprep.subr.mxu0 0.0
        %739 = vmatpush2.msra.mxu0 0.0
        %740 = vmatprep.subr.mxu0 0.0
        %741 = vmatpush2.msra.mxu0 0.0
        %742 = vmatprep.subr.mxu0 0.0
        %743 = vmatpush2.msra.mxu0 0.0
        %744 = vmatprep.subr.mxu0 0.0
        %745 = vmatpush2.msra.mxu0 0.0
        %746 = vmatprep.subr.mxu0 0.0
        %747 = vmatpush2.msra.mxu0 0.0
        %748 = vmatprep.subr.mxu0 0.0
        %749 = vmatpush2.msra.mxu0 0.0
        %750 = vmatprep.subr.mxu0 0.0
        %751 = vmatpush2.msra.mxu0 0.0
        %752 = vmatprep.subr.mxu0 0.0
        %753 = vmatpush2.msra.mxu0 0.0
        %754 = vmatprep.mubr.f32.mxu0 0.0
        %755 = vmatmul.mubr.f32.gmra.mxu0 %v590
        %v756 = vpop.f32.mrf.mxu0
        %v757 = vadd.f32 %v571, %v756
        %v758 = vpop.f32.mrf.mxu0
        %v759 = vadd.f32 %v571, %v758
        %760 = vmatprep.mubr.f32.mxu0 0.0
        %761 = vmatmul.mubr.f32.gmra.mxu0 %v593
        %v762 = vpop.f32.mrf.mxu0
        %v763 = vadd.f32 %v576, %v762
        %v764 = vpop.f32.mrf.mxu0
        %v765 = vadd.f32 %v576, %v764
        %766 = vmatprep.mubr.f32.mxu0 0.0
        %767 = vmatmul.mubr.f32.gmra.mxu0 %v596
        %v768 = vpop.f32.mrf.mxu0
        %v769 = vadd.f32 %v581, %v768
        %v770 = vpop.f32.mrf.mxu0
        %v771 = vadd.f32 %v581, %v770
        %772 = vmatprep.mubr.f32.mxu0 0.0
        %773 = vmatmul.mubr.f32.gmra.mxu0 %v599
        %v774 = vpop.f32.mrf.mxu0
        %v775 = vadd.f32 %v586, %v774
        %v776 = vpop.f32.mrf.mxu0
        %v777 = vadd.f32 %v586, %v776
        %778 = vdwg.mxu0
        %v779 = vxor.u32 %v668, 2147483648
        %v780 = vxor.u32 %v670, 2147483648
        %v781 = vxor.u32 %v757, 2147483648
        %v782 = vxor.u32 %v759, 2147483648
        %v783 = vxor.u32 %v674, 2147483648
        %v784 = vxor.u32 %v676, 2147483648
        %v785 = vxor.u32 %v763, 2147483648
        %v786 = vxor.u32 %v765, 2147483648
        %v787 = vxor.u32 %v680, 2147483648
        %v788 = vxor.u32 %v682, 2147483648
        %v789 = vxor.u32 %v769, 2147483648
        %v790 = vxor.u32 %v771, 2147483648
        %v791 = vxor.u32 %v686, 2147483648
        %v792 = vxor.u32 %v688, 2147483648
        %v793 = vxor.u32 %v775, 2147483648
        %v794 = vxor.u32 %v777, 2147483648
        %v795 = vmul.f32 %v779, 1.442695
        %v796 = vpow.pop %v795
        %v797 = vmul.f32 %v780, 1.442695
        %v798 = vpow.pop %v797
        %v799 = vmul.f32 %v781, 1.442695
        %v800 = vpow.pop %v799
        %v801 = vmul.f32 %v782, 1.442695
        %v802 = vpow.pop %v801
        %v803 = vmul.f32 %v783, 1.442695
        %v804 = vpow.pop %v803
        %v805 = vmul.f32 %v784, 1.442695
        %v806 = vpow.pop %v805
        %v807 = vmul.f32 %v785, 1.442695
        %v808 = vpow.pop %v807
        %v809 = vmul.f32 %v786, 1.442695
        %v810 = vpow.pop %v809
        %v811 = vmul.f32 %v787, 1.442695
        %v812 = vpow.pop %v811
        %v813 = vmul.f32 %v788, 1.442695
        %v814 = vpow.pop %v813
        %v815 = vmul.f32 %v789, 1.442695
        %v816 = vpow.pop %v815
        %v817 = vmul.f32 %v790, 1.442695
        %v818 = vpow.pop %v817
        %v819 = vmul.f32 %v791, 1.442695
        %v820 = vpow.pop %v819
        %v821 = vmul.f32 %v792, 1.442695
        %v822 = vpow.pop %v821
        %v823 = vmul.f32 %v793, 1.442695
        %v824 = vpow.pop %v823
        %v825 = vmul.f32 %v794, 1.442695
        %v826 = vpow.pop %v825
        %v827 = vadd.f32 %v796, 1.0
        %v828 = vadd.f32 %v798, 1.0
        %v829 = vadd.f32 %v800, 1.0
        %v830 = vadd.f32 %v802, 1.0
        %v831 = vadd.f32 %v804, 1.0
        %v832 = vadd.f32 %v806, 1.0
        %v833 = vadd.f32 %v808, 1.0
        %v834 = vadd.f32 %v810, 1.0
        %v835 = vadd.f32 %v812, 1.0
        %v836 = vadd.f32 %v814, 1.0
        %v837 = vadd.f32 %v816, 1.0
        %v838 = vadd.f32 %v818, 1.0
        %v839 = vadd.f32 %v820, 1.0
        %v840 = vadd.f32 %v822, 1.0
        %v841 = vadd.f32 %v824, 1.0
        %v842 = vadd.f32 %v826, 1.0
        %v843 = vrcp.pop %v827
        %v844 = vmul.f32 1.0, %v843
        %v845 = vrcp.pop %v828
        %v846 = vmul.f32 1.0, %v845
        %v847 = vrcp.pop %v829
        %v848 = vmul.f32 1.0, %v847
        %v849 = vrcp.pop %v830
        %v850 = vmul.f32 1.0, %v849
        %v851 = vrcp.pop %v831
        %v852 = vmul.f32 1.0, %v851
        %v853 = vrcp.pop %v832
        %v854 = vmul.f32 1.0, %v853
        %v855 = vrcp.pop %v833
        %v856 = vmul.f32 1.0, %v855
        %v857 = vrcp.pop %v834
        %v858 = vmul.f32 1.0, %v857
        %v859 = vrcp.pop %v835
        %v860 = vmul.f32 1.0, %v859
        %v861 = vrcp.pop %v836
        %v862 = vmul.f32 1.0, %v861
        %v863 = vrcp.pop %v837
        %v864 = vmul.f32 1.0, %v863
        %v865 = vrcp.pop %v838
        %v866 = vmul.f32 1.0, %v865
        %v867 = vrcp.pop %v839
        %v868 = vmul.f32 1.0, %v867
        %v869 = vrcp.pop %v840
        %v870 = vmul.f32 1.0, %v869
        %v871 = vrcp.pop %v841
        %v872 = vmul.f32 1.0, %v871
        %v873 = vrcp.pop %v842
        %v874 = vmul.f32 1.0, %v873
        %v875 = vmul.f32 %v668, %v844
        %v876 = vmul.f32 %v670, %v846
        %v877 = vmul.f32 %v757, %v848
        %v878 = vmul.f32 %v759, %v850
        %v879 = vmul.f32 %v674, %v852
        %v880 = vmul.f32 %v676, %v854
        %v881 = vmul.f32 %v763, %v856
        %v882 = vmul.f32 %v765, %v858
        %v883 = vmul.f32 %v680, %v860
        %v884 = vmul.f32 %v682, %v862
        %v885 = vmul.f32 %v769, %v864
        %v886 = vmul.f32 %v771, %v866
        %v887 = vmul.f32 %v686, %v868
        %v888 = vmul.f32 %v688, %v870
        %v889 = vmul.f32 %v775, %v872
        %v890 = vmul.f32 %v777, %v874
        %v891 = vld [vmem:[%s7] sm:$0xf]
        %v892 = vld [vmem:[%s8] sm:$0xf]
        %894 = vset.pattern.permute.xlu0 0
        %895 = vperm.xlu0 %894, %v892
        %v896 = vpop.permute.xlu0 %895
        %vm898 = vcmask 261120
        %v900 = vsel %vm898, %v891, 0
        %902 = vmatprep.subr.mxu0 0.0
        %903 = vmatpush1.msra.mxu0 0.0
        %904 = vmatprep.subr.mxu0 0.0
        %905 = vmatpush1.msra.mxu0 0.0
        %906 = vmatprep.subr.mxu0 0.0
        %907 = vmatpush1.msra.mxu0 0.0
        %908 = vmatprep.subr.mxu0 0.0
        %909 = vmatpush1.msra.mxu0 0.0
        %910 = vmatprep.subr.mxu0 0.0
        %911 = vmatpush1.msra.mxu0 0.0
        %912 = vmatprep.subr.mxu0 0.0
        %913 = vmatpush1.msra.mxu0 0.0
        %914 = vmatprep.subr.mxu0 0.0
        %915 = vmatpush1.msra.mxu0 0.0
        %916 = vmatprep.subr.mxu0 0.0
        %917 = vmatpush1.msra.mxu0 0.0
        %918 = vmatprep.subr.mxu0 0.0
        %919 = vmatpush1.msra.mxu0 0.0
        %920 = vmatprep.subr.mxu0 0.0
        %921 = vmatpush1.msra.mxu0 0.0
        %922 = vmatprep.subr.mxu0 0.0
        %923 = vmatpush1.msra.mxu0 0.0
        %924 = vmatprep.subr.mxu0 0.0
        %925 = vmatpush1.msra.mxu0 0.0
        %926 = vmatprep.subr.mxu0 %v888
        %927 = vmatpush1.msra.mxu0 %v887
        %928 = vmatprep.subr.mxu0 %v884
        %929 = vmatpush1.msra.mxu0 %v883
        %930 = vmatprep.subr.mxu0 %v880
        %931 = vmatpush1.msra.mxu0 %v879
        %932 = vmatprep.subr.mxu0 %v876
        %933 = vmatpush1.msra.mxu0 %v875
        %934 = vmatprep.subr.mxu0 0.0
        %935 = vmatpush2.msra.mxu0 0.0
        %936 = vmatprep.subr.mxu0 0.0
        %937 = vmatpush2.msra.mxu0 0.0
        %938 = vmatprep.subr.mxu0 0.0
        %939 = vmatpush2.msra.mxu0 0.0
        %940 = vmatprep.subr.mxu0 0.0
        %941 = vmatpush2.msra.mxu0 0.0
        %942 = vmatprep.subr.mxu0 0.0
        %943 = vmatpush2.msra.mxu0 0.0
        %944 = vmatprep.subr.mxu0 0.0
        %945 = vmatpush2.msra.mxu0 0.0
        %946 = vmatprep.subr.mxu0 0.0
        %947 = vmatpush2.msra.mxu0 0.0
        %948 = vmatprep.subr.mxu0 0.0
        %949 = vmatpush2.msra.mxu0 0.0
        %950 = vmatprep.subr.mxu0 0.0
        %951 = vmatpush2.msra.mxu0 0.0
        %952 = vmatprep.subr.mxu0 0.0
        %953 = vmatpush2.msra.mxu0 0.0
        %954 = vmatprep.subr.mxu0 0.0
        %955 = vmatpush2.msra.mxu0 0.0
        %956 = vmatprep.subr.mxu0 0.0
        %957 = vmatpush2.msra.mxu0 0.0
        %958 = vmatprep.subr.mxu0 0.0
        %959 = vmatpush2.msra.mxu0 0.0
        %960 = vmatprep.subr.mxu0 0.0
        %961 = vmatpush2.msra.mxu0 0.0
        %962 = vmatprep.subr.mxu0 0.0
        %963 = vmatpush2.msra.mxu0 0.0
        %964 = vmatprep.subr.mxu0 0.0
        %965 = vmatpush2.msra.mxu0 0.0
        %966 = vmatprep.mubr.f32.mxu0 0.0
        %967 = vmatmul.mubr.f32.gmra.mxu0 %v900
        %v968 = vpop.f32.mrf.mxu0
        %v969 = vadd.f32 %v896, %v968
        %v970 = vpop.f32.mrf.mxu0
        %v971 = vadd.f32 %v896, %v970
        %972 = vdwg.mxu0
        %973 = vmatprep.subr.mxu0 0.0
        %974 = vmatpush1.msra.mxu0 0.0
        %975 = vmatprep.subr.mxu0 0.0
        %976 = vmatpush1.msra.mxu0 0.0
        %977 = vmatprep.subr.mxu0 0.0
        %978 = vmatpush1.msra.mxu0 0.0
        %979 = vmatprep.subr.mxu0 0.0
        %980 = vmatpush1.msra.mxu0 0.0
        %981 = vmatprep.subr.mxu0 0.0
        %982 = vmatpush1.msra.mxu0 0.0
        %983 = vmatprep.subr.mxu0 0.0
        %984 = vmatpush1.msra.mxu0 0.0
        %985 = vmatprep.subr.mxu0 0.0
        %986 = vmatpush1.msra.mxu0 0.0
        %987 = vmatprep.subr.mxu0 0.0
        %988 = vmatpush1.msra.mxu0 0.0
        %989 = vmatprep.subr.mxu0 0.0
        %990 = vmatpush1.msra.mxu0 0.0
        %991 = vmatprep.subr.mxu0 0.0
        %992 = vmatpush1.msra.mxu0 0.0
        %993 = vmatprep.subr.mxu0 0.0
        %994 = vmatpush1.msra.mxu0 0.0
        %995 = vmatprep.subr.mxu0 0.0
        %996 = vmatpush1.msra.mxu0 0.0
        %997 = vmatprep.subr.mxu0 %v890
        %998 = vmatpush1.msra.mxu0 %v889
        %999 = vmatprep.subr.mxu0 %v886
        %1000 = vmatpush1.msra.mxu0 %v885
        %1001 = vmatprep.subr.mxu0 %v882
        %1002 = vmatpush1.msra.mxu0 %v881
        %1003 = vmatprep.subr.mxu0 %v878
        %1004 = vmatpush1.msra.mxu0 %v877
        %1005 = vmatprep.subr.mxu0 0.0
        %1006 = vmatpush2.msra.mxu0 0.0
        %1007 = vmatprep.subr.mxu0 0.0
        %1008 = vmatpush2.msra.mxu0 0.0
        %1009 = vmatprep.subr.mxu0 0.0
        %1010 = vmatpush2.msra.mxu0 0.0
        %1011 = vmatprep.subr.mxu0 0.0
        %1012 = vmatpush2.msra.mxu0 0.0
        %1013 = vmatprep.subr.mxu0 0.0
        %1014 = vmatpush2.msra.mxu0 0.0
        %1015 = vmatprep.subr.mxu0 0.0
        %1016 = vmatpush2.msra.mxu0 0.0
        %1017 = vmatprep.subr.mxu0 0.0
        %1018 = vmatpush2.msra.mxu0 0.0
        %1019 = vmatprep.subr.mxu0 0.0
        %1020 = vmatpush2.msra.mxu0 0.0
        %1021 = vmatprep.subr.mxu0 0.0
        %1022 = vmatpush2.msra.mxu0 0.0
        %1023 = vmatprep.subr.mxu0 0.0
        %1024 = vmatpush2.msra.mxu0 0.0
        %1025 = vmatprep.subr.mxu0 0.0
        %1026 = vmatpush2.msra.mxu0 0.0
        %1027 = vmatprep.subr.mxu0 0.0
        %1028 = vmatpush2.msra.mxu0 0.0
        %1029 = vmatprep.subr.mxu0 0.0
        %1030 = vmatpush2.msra.mxu0 0.0
        %1031 = vmatprep.subr.mxu0 0.0
        %1032 = vmatpush2.msra.mxu0 0.0
        %1033 = vmatprep.subr.mxu0 0.0
        %1034 = vmatpush2.msra.mxu0 0.0
        %1035 = vmatprep.subr.mxu0 0.0
        %1036 = vmatpush2.msra.mxu0 0.0
        %1037 = vmatprep.mubr.f32.mxu0 0.0
        %1038 = vmatmul.mubr.f32.gmra.mxu0 %v900
        %v1039 = vpop.f32.mrf.mxu0
        %v1040 = vadd.f32 %v896, %v1039
        %v1041 = vpop.f32.mrf.mxu0
        %v1042 = vadd.f32 %v896, %v1041
        %1043 = vdwg.mxu0
        %v1048 = vcombine.low %v969, %v971
        %v1049 = vcombine.low %v1040, %v1042
        %1052 = vst [vmem:[%s472] sm:$0xff] %v1048
        %1053 = vst [vmem:[%s472 + $0x8] sm:$0xff] %v1049
        %v1056 = vcombine.high %v523, %v523
        %v1057 = vcombine.high %v524, %v524
        %v1060 = vsub.f32 %v969, %v523
        %v1061 = vsub.f32 %v971, %v1056
        %v1062 = vsub.f32 %v1040, %v524
        %v1063 = vsub.f32 %v1042, %v1057
        %p1064 = scmp.eq.s32.totalorder %s32, 0
        // Predicated region
        $region65: #{tpu_custom_call.1} parent=55 // pred_check
          %p1065 = pneg %p1064
        $region66: #{tpu_custom_call.1} parent=55 // pred_check_branch
          %1067 = sbr.rel (%p1065) target = $region68
        $region67: #{tpu_custom_call.1} parent=55 // pred_region
          %vm1068 = vcmask 0
          %1069 = vst.msk [vmem:[%s516] sm:$0x1] %vm1068, 0.0
        $region68: #{tpu_custom_call.1} parent=55 // pred_fallthru
          _
        %v1070 = vld [vmem:[%s516] sm:$0x1]
        %v1071 = vmul.f32 %v1060, %v1060
        %v1072 = vmul.f32 %v1061, %v1061
        %v1073 = vmul.f32 %v1062, %v1062
        %v1074 = vmul.f32 %v1063, %v1063
        %vm1075 = vcmask 1043456
        %v1076 = vsel %vm1075, %v1071, 0.0
        %v1077 = vsel %vm1075, %v1072, 0.0
        %v1078 = vadd.f32 %v1076, %v1077
        %v1079 = vsel %vm1075, %v1073, 0.0
        %v1080 = vadd.f32 %v1078, %v1079
        %v1081 = vsel %vm1075, %v1074, 0.0
        %v1082 = vadd.f32 %v1080, %v1081
        %1083 = vadd.xlane.f32.xlu0 %v1082
        %v1084 = vpop.xlane.xlu0 %1083
        %v1085 = vrot.slane %v1084, 4
        %v1086 = vadd.f32 %v1084, %v1085
        %v1087 = vrot.slane %v1086, 2
        %v1088 = vadd.f32 %v1086, %v1087
        %v1089 = vrot.slane %v1088, 1
        %v1090 = vadd.f32 %v1088, %v1089
        %s1091 = vtos %v1090
        %v1092 = vstv %s1091
        %v1093 = vadd.f32 %v1070, %v1092
        %vm1094 = vcmask 0
        %1095 = vst.msk [vmem:[%s516] sm:$0x1] %vm1094, %v1093
        %s1096 = sand.u32 %s264, 1
        %s1097 = scalar_lea.sflag [#allocation4], %s1096
        %s1098 = sand.u32 %s264, 1
        %s1099 = smul.addr %s1098, 16
        %s1100 = scalar_lea.vmem [#allocation8], %s1099
        %p1101 = scmp.lt.s32.totalorder %s31, 1
        %s1102 = scalar_select %p1101, %s31, 1
        %s1103 = scalar_lea.vmem %s10, %s1102
        // Predicated region
        $region69: #{tpu_custom_call.1} parent=55 // pred_check
          %p1104 = pneg %p274
        $region70: #{tpu_custom_call.1} parent=55 // pred_check_branch
          %1106 = sbr.rel (%p1104) target = $region72
        $region71: #{tpu_custom_call.1} parent=55 // pred_region
          %s1107 = smul.u32 4, %s32
          %s1109 = ssub.s32 256, 256
          %1110 = vsyncadd %s1097, %s1109
          %s1111 = smul.addr %s31, 4
          %s1112 = sadd.s32 %s1107, %s1111
          %s1113 = smul.addr %s1112, 64
          %s1114 = scalar_lea.hbm %s9, %s1113
          %s1116 = sshll.u32 %s1100, 4
          %s1117 = int_to_ptr.vmem [resolvable:$true] %s1116
          %1119 = dma.vmem_to_hbm [thread:$0]  %s1117, 256, %s1114, %s1097
        $region72: #{tpu_custom_call.1} parent=55 // pred_fallthru
          _
        // Predicated region
        $region73: #{tpu_custom_call.1} parent=55 // pred_check
          %p1120 = pneg %p300
        $region74: #{tpu_custom_call.1} parent=55 // pred_check_branch
          %1122 = sbr.rel (%p1120) target = $region76
        $region75: #{tpu_custom_call.1} parent=55 // pred_region
          _
        $region76: #{tpu_custom_call.1} parent=55 // pred_fallthru
          _
      $region56: #{tpu_custom_call.1} parent=5 // pred_fallthru
        _
      %p1123 = scmp.le.s32.totalorder 2, %s22
      // Predicated region
      $region77: #{tpu_custom_call.1} parent=5 // pred_check
        %p1124 = pneg %p1123
      $region78: #{tpu_custom_call.1} parent=5 // pred_check_branch
        %1126 = sbr.rel (%p1124) target = $region80
      $region79: #{tpu_custom_call.1} parent=5 // pred_region
        %s1127 = ssub.s32 %s22, 2
        // Predicated region
        $region81: #{tpu_custom_call.1} parent=79 // pred_check
          %p1128 = pneg %p280
        $region82: #{tpu_custom_call.1} parent=79 // pred_check_branch
          %1130 = sbr.rel (%p1128) target = $region84
        $region83: #{tpu_custom_call.1} parent=79 // pred_region
          %s1131 = sand.u32 %s265, 1
          %s1132 = scalar_lea.sflag [#allocation4], %s1131
          %s1133 = sand.u32 %s265, 1
          %s1134 = smul.addr %s1133, 16
          %s1135 = scalar_lea.vmem [#allocation8], %s1134
          %1136 = dma.done %s1132, 256
        $region84: #{tpu_custom_call.1} parent=79 // pred_fallthru
          _
        // Predicated region
        $region85: #{tpu_custom_call.1} parent=79 // pred_check
          %p1137 = pneg %p306
        $region86: #{tpu_custom_call.1} parent=79 // pred_check_branch
          %1139 = sbr.rel (%p1137) target = $region88
        $region87: #{tpu_custom_call.1} parent=79 // pred_region
          %p1140 = scmp.lt.s32.totalorder %s33, 1
          %s1141 = scalar_select %p1140, %s33, 1
          %s1142 = scalar_lea.vmem %s10, %s1141
        $region88: #{tpu_custom_call.1} parent=79 // pred_fallthru
          _
      $region80: #{tpu_custom_call.1} parent=5 // pred_fallthru
        _
    $region6: #{tpu_custom_call.1} parent=1 // loop_footer
      %s26 = sadd.s32 1, %s22
    $region7: #{tpu_custom_call.1} parent=1 // loop_footer_branch
      %21 = sbr.rel target = $region3
    $region8: #{tpu_custom_call.1} parent=1 // loop_exit
      _
    %1143 = vsyncpa [#allocation4], 1
    %s1144 = scalar_lea.sflag [#allocation4], 1
    %1145 = vsyncpa %s1144, 1
    %1146 = vsyncpa [#allocation5], 1
    %s1147 = scalar_lea.sflag [#allocation5], 1
    %1148 = vsyncpa %s1147, 1
    %1149 = vsyncpa [#allocation7], 1

</llo_original>
